<compile_context>
chip_gen: v7x
topology: tpu7x:2x2x1
jax: 0.10.0
libtpu: 0.0.40
codegen_flags: <defaults>
</compile_context>

<pallas_src>
import jax
import jax.numpy as jnp
from jax.experimental import pallas as pl
from jax.experimental.pallas import tpu as pltpu


# ---------------------------------------------------------------------------
# Primary path: zero-copy (output aliases the input HBM buffer).
# ---------------------------------------------------------------------------
def _squish_alias_kernel(x_hbm_ref, o_hbm_ref):
    del x_hbm_ref  # unused: the output buffer *is* the input buffer.
    # Ordering pin on the aliased output; no data movement is emitted.
    pltpu.touch(o_hbm_ref)


def _alias_call(x):
    return pl.pallas_call(
        _squish_alias_kernel,
        out_shape=jax.ShapeDtypeStruct(x.shape, x.dtype),
        in_specs=[pl.BlockSpec(memory_space=pl.ANY)],
        out_specs=pl.BlockSpec(memory_space=pl.ANY),
        input_output_aliases={0: 0},
        compiler_params=pltpu.CompilerParams(has_side_effects=True),
        cost_estimate=pl.CostEstimate(flops=0, transcendentals=0,
                                      bytes_accessed=0),
    )(x)


# ---------------------------------------------------------------------------
# Fallback path: explicit physical copy with multiple outstanding HBM DMAs.
# ---------------------------------------------------------------------------
def _dim0_chunks(n0, slab_bytes, min_chunk_bytes=4 << 20, max_chunks=8):
    """Static (start, size) chunks along dim 0, each >= min_chunk_bytes
    (to amortize ~1us per-descriptor setup), at most max_chunks chunks."""
    total = n0 * slab_bytes
    n = min(max_chunks, max(1, total // min_chunk_bytes), n0)
    n = max(1, int(n))
    base, rem = divmod(n0, n)
    chunks, start = [], 0
    for i in range(n):
        size = base + (1 if i < rem else 0)  # remainder-safe
        chunks.append((start, size))
        start += size
    return tuple(chunks)


def _make_chunked_copy_kernel(chunks):
    def kernel(x_hbm_ref, o_hbm_ref, sems):
        copies = [
            pltpu.make_async_copy(
                x_hbm_ref.at[pl.ds(start, size)],
                o_hbm_ref.at[pl.ds(start, size)],
                sems.at[i],
            )
            for i, (start, size) in enumerate(chunks)
        ]
        # Issue every chunk before waiting on any: multiple in-flight DMAs get
        # closer to HBM roofline than one serialized start()/wait() pair.
        for cp in copies:
            cp.start()
        for cp in copies:
            cp.wait()
    return kernel


def _copy_call(x):
    n0 = x.shape[0]
    slab_bytes = (x.size // n0) * x.dtype.itemsize
    chunks = _dim0_chunks(n0, slab_bytes)
    nbytes = x.size * x.dtype.itemsize
    return pl.pallas_call(
        _make_chunked_copy_kernel(chunks),
        out_shape=jax.ShapeDtypeStruct(x.shape, x.dtype),
        in_specs=[pl.BlockSpec(memory_space=pl.ANY)],
        out_specs=pl.BlockSpec(memory_space=pl.ANY),
        scratch_shapes=[pltpu.SemaphoreType.DMA((len(chunks),))],
        cost_estimate=pl.CostEstimate(flops=0, transcendentals=0,
                                      bytes_accessed=2 * nbytes),
    )(x)


# ---------------------------------------------------------------------------
# Wrapper: SquishMetaBatch.forward
# ---------------------------------------------------------------------------
def squish_meta_batch(x, *, force_copy=False):
    """SquishMetaBatch.forward: (M, B, *rest) -> (M*B, *rest)."""
    M, B = x.shape[0], x.shape[1]
    rest = tuple(x.shape[2:])
    out_shape = (M * B,) + rest

    if x.size == 0:
        # Zero-element edge case: no zero-byte DMA / no kernel needed.
        return jnp.reshape(x, out_shape)

    if force_copy:
        out = _copy_call(x)
    else:
        try:
            out = _alias_call(x)
        except Exception:
            # If the alias/touch path is unsupported by this Pallas build,
            # fall back to the physical chunked-DMA copy.
            out = _copy_call(x)

    # Metadata-only collapse of the leading (meta_batch, batch) axes.
    return jnp.reshape(out, out_shape)


if __name__ == "__main__":
    key = jax.random.PRNGKey(0)
    # meta_batch=2, batch=4, channels=4, spatial=16x16
    x = jax.random.normal(key, (2, 4, 4, 16, 16), dtype=jnp.float32)

    # Reference: plain reshape collapsing the first two dims.
    ref = x.reshape(-1, *x.shape[2:])

    # Primary zero-copy (aliased) kernel.
    out = jax.block_until_ready(squish_meta_batch(x))
    assert out.shape == ref.shape, (out.shape, ref.shape)
    assert jnp.array_equal(out, ref), "aliased path does not match reference"

    # Explicit physical-copy kernel (chunked, multiple outstanding HBM DMAs).
    out_copy = jax.block_until_ready(squish_meta_batch(x, force_copy=True))
    assert out_copy.shape == ref.shape, (out_copy.shape, ref.shape)
    assert jnp.array_equal(out_copy, ref), "copy path does not match reference"

    # TODO(synk): the PyTorch module also stores self.meta_batch_size =
    # inputs.size(0); that is Python-side module state with no tensor-op
    # (and hence no Pallas) equivalent.
    print("KERNEL_OK")
</pallas_src>

<mosaic_0001>
module attributes {stable_mosaic.version = 11 : i64} {
  func.func @_squish_alias_kernel(%arg0: memref<2x4x4x16x16xf32, #tpu.memory_space<any>>, %arg1: memref<2x4x4x16x16xf32, #tpu.memory_space<any>>) attributes {dimension_semantics = [], scalar_prefetch = 0 : i64, scratch_operands = 0 : i64, tpu.core_type = #tpu.core_type<tc>} {
    return
  }
}

module attributes {stable_mosaic.version = 11 : i64} {
  func.func @kernel(%arg0: memref<2x4x4x16x16xf32, #tpu.memory_space<any>>, %arg1: memref<2x4x4x16x16xf32, #tpu.memory_space<any>>, %arg2: memref<1x!tpu.dma_semaphore, #tpu.memory_space<semaphore_mem>>) attributes {dimension_semantics = [], scalar_prefetch = 0 : i64, scratch_operands = 1 : i64, tpu.core_type = #tpu.core_type<tc>} {
    %c0_i32 = arith.constant 0 : i32
    %c0_i32_0 = arith.constant 0 : i32
    %c0_i32_1 = arith.constant 0 : i32
    %c0_i32_2 = arith.constant 0 : i32
    %c0_i32_3 = arith.constant 0 : i32
    %c0_i32_4 = arith.constant 0 : i32
    %0 = tpu.memref_slice %arg0[%c0_i32_0, %c0_i32_1, %c0_i32_2, %c0_i32_3, %c0_i32_4] : memref<2x4x4x16x16xf32, #tpu.memory_space<any>> -> memref<2x4x4x16x16xf32, #tpu.memory_space<any>>
    %c0_i32_5 = arith.constant 0 : i32
    %c0_i32_6 = arith.constant 0 : i32
    %c0_i32_7 = arith.constant 0 : i32
    %c0_i32_8 = arith.constant 0 : i32
    %c0_i32_9 = arith.constant 0 : i32
    %1 = tpu.memref_slice %arg1[%c0_i32_5, %c0_i32_6, %c0_i32_7, %c0_i32_8, %c0_i32_9] : memref<2x4x4x16x16xf32, #tpu.memory_space<any>> -> memref<2x4x4x16x16xf32, #tpu.memory_space<any>>
    %2 = tpu.memref_slice %arg2[%c0_i32] : memref<1x!tpu.dma_semaphore, #tpu.memory_space<semaphore_mem>> -> memref<1x!tpu.dma_semaphore, #tpu.memory_space<semaphore_mem>>
    %3 = tpu.memref_squeeze %2 : memref<1x!tpu.dma_semaphore, #tpu.memory_space<semaphore_mem>> -> memref<!tpu.dma_semaphore, #tpu.memory_space<semaphore_mem>>
    tpu.enqueue_dma source(%0 : memref<2x4x4x16x16xf32, #tpu.memory_space<any>>) target(%1 : memref<2x4x4x16x16xf32, #tpu.memory_space<any>>) target_semaphore(%3 : memref<!tpu.dma_semaphore, #tpu.memory_space<semaphore_mem>>)
    %c0_i32_10 = arith.constant 0 : i32
    %c0_i32_11 = arith.constant 0 : i32
    %c0_i32_12 = arith.constant 0 : i32
    %c0_i32_13 = arith.constant 0 : i32
    %c0_i32_14 = arith.constant 0 : i32
    %c0_i32_15 = arith.constant 0 : i32
    %4 = tpu.memref_slice %arg0[%c0_i32_11, %c0_i32_12, %c0_i32_13, %c0_i32_14, %c0_i32_15] : memref<2x4x4x16x16xf32, #tpu.memory_space<any>> -> memref<2x4x4x16x16xf32, #tpu.memory_space<any>>
    %c0_i32_16 = arith.constant 0 : i32
    %c0_i32_17 = arith.constant 0 : i32
    %c0_i32_18 = arith.constant 0 : i32
    %c0_i32_19 = arith.constant 0 : i32
    %c0_i32_20 = arith.constant 0 : i32
    %5 = tpu.memref_slice %arg1[%c0_i32_16, %c0_i32_17, %c0_i32_18, %c0_i32_19, %c0_i32_20] : memref<2x4x4x16x16xf32, #tpu.memory_space<any>> -> memref<2x4x4x16x16xf32, #tpu.memory_space<any>>
    %6 = tpu.memref_slice %arg2[%c0_i32_10] : memref<1x!tpu.dma_semaphore, #tpu.memory_space<semaphore_mem>> -> memref<1x!tpu.dma_semaphore, #tpu.memory_space<semaphore_mem>>
    %7 = tpu.memref_squeeze %6 : memref<1x!tpu.dma_semaphore, #tpu.memory_space<semaphore_mem>> -> memref<!tpu.dma_semaphore, #tpu.memory_space<semaphore_mem>>
    tpu.wait_dma2 semaphore(%7 : memref<!tpu.dma_semaphore, #tpu.memory_space<semaphore_mem>>) src(%4 : memref<2x4x4x16x16xf32, #tpu.memory_space<any>>) dst(%5 : memref<2x4x4x16x16xf32, #tpu.memory_space<any>>)
    return
  }
}

</mosaic_0001>

<llo_original>
// kernel: tpu_custom_call.1
$region0: #{tpu_custom_call.1}
  #allocation0 [shape = 'u32[]', space=smem, size = 0x4, offset = 0x4, fixed_abs, tag = 'smem constant byte address 0x4 - core index']
  #allocation1 [shape = 'u32[144,128]{1,0:T(1,128)}', space=vmem, size = 0x12000, scoped, tag = 'internal scratch']
  %s0 = inlined_call_operand.hbm [shape: f32[2,4,4,16,16], index: 0, kind: input, shape index: {}, may-alias: {0,1}]
  %s1 = inlined_call_operand.hbm [shape: f32[2,4,4,16,16], index: 1, kind: output, shape index: {}, may-alias: {0,1}]
  %s2 = sld [smem:[#allocation0]]
  $region2: #{tpu_custom_call.1} parent=0
    _
  %s4 = ssub.s32 1, %s2
  %s5 = scalar_select 0, %s4, %s2

// kernel: tpu_custom_call.1
$region0: #{tpu_custom_call.1}
  #allocation0 [shape = 'u32[]', space=smem, size = 0x4, offset = 0x4, fixed_abs, tag = 'smem constant byte address 0x4 - core index']
  #allocation1 [shape = 'u32[144,128]{1,0:T(1,128)}', space=vmem, size = 0x12000, scoped, tag = 'internal scratch']
  #allocation2 [shape = 's32[1]{0}', space=sflag, size = 0x4, scoped, tag = 'scratch operand']
  #allocation3 [shape = 's32[]', space=sflag, size = 0x4, offset = 0, fixed_abs, tag = 'sflag constant byte address 0x0 - dummy sync flag']
  #allocation4 [shape = 'u32[0]{0}', space=smem, size = 0, offset = 0, fixed_abs, tag = 'smem constant byte address 0x0 - null']
  %s0 = inlined_call_operand.hbm [shape: f32[2,4,4,16,16], index: 0, kind: input, shape index: {}]
  %s1 = inlined_call_operand.hbm [shape: f32[2,4,4,16,16], index: 1, kind: output, shape index: {}]
  %s2 = sld [smem:[#allocation0]]
  $region2: #{tpu_custom_call.1} parent=0
    _
  %s4 = ssub.s32 1, %s2
  %s5 = scalar_select 0, %s4, %s2
  %s7 = sshll.u32 1, 14
  %s8 = sxor.u32 4294967295, %s7
  %s11 = sshll.u32 3, 24
  %s12 = sxor.u32 4294967295, %s11
  %s13 = sand.u32 0, %s12
  %s15 = sor.u32 %s13, 0
  %18 = dma.general %s0, 8192, %s1, [#allocation2], [#allocation3], [#allocation4], %s15, 0
  %s19 = smul.u32 2, 4
  %s20 = smul.u32 %s19, 4
  %s21 = smul.u32 %s20, 16
  %s22 = smul.u32 %s21, 1
  %s23 = sshll.u32 %s22, 4
  %24 = dma.done [#allocation2], %s23
  %25 = vsyncmov [#allocation2]
  %s26 = vpop.sfrf %25
  %p27 = scmp.eq.s32.totalorder %s26, 0
  %p28 = pneg %p27
  %30 = shalt.err (%p28)

</llo_original>
